<compile_context>
chip_gen: v5e
topology: v5e:2x2
jax: 0.10.0
libtpu: 0.0.40
codegen_flags: <defaults>
</compile_context>

<pallas_src>
import numpy as np
import jax
import jax.numpy as jnp
from jax.experimental import pallas as pl
from jax.experimental.pallas import tpu as pltpu


# ----------------------------------------------------------------------------------
# Host-side constant matrices (built once in __init__, never per training step).
# ----------------------------------------------------------------------------------
def _kron_pool_matrix(res):
    """[res*res, (res//2)**2]: x_flat @ M == 2x2 average pool on row-major flattened pixels."""
    ro = res // 2
    ph = np.zeros((ro, res), np.float32)
    idx = np.arange(ro)
    ph[idx, 2 * idx] = 0.5
    ph[idx, 2 * idx + 1] = 0.5
    # M[h*res+w, p*ro+q] = ph[p,h] * ph[q,w]  ==  kron(ph, ph).T
    return np.kron(ph, ph).T.astype(np.float32)


def _chan_select_matrix(num_faces, num_chan, coarse_pixels):
    """[C, F*C]: sel @ coarsest_mip, lane-reduced, gives per-channel ambient means.

    NOTE: assumes cubemap rows are interleaved as row = face*C + channel (channel-inner),
    matching the [F*C, H, W] -> [F*C, H*W] reshape used throughout this file.
    """
    m = np.zeros((num_chan, num_faces * num_chan), np.float32)
    for c in range(num_chan):
        m[c, c::num_chan] = 1.0 / (num_faces * coarse_pixels)
    return m


# ----------------------------------------------------------------------------------
# Shared in-kernel compute helpers (operate on VMEM-resident arrays).
# ----------------------------------------------------------------------------------
def _mip_chain(x_bf16, k_refs, mip_refs):
    """One bf16 MXU matmul per level; stores f32 mips; returns the coarsest f32 mip."""
    cur = x_bf16                                              # bf16 [F*C, H*W]
    last = None
    for k_ref, mip_ref in zip(k_refs, mip_refs):
        last = jnp.dot(cur, k_ref[...], preferred_element_type=jnp.float32)
        mip_ref[...] = last
        cur = last.astype(jnp.bfloat16)
    return last                                               # f32 [F*C, P_coarse]


def _ambient_column(sel, last_mip):
    """[C,1] per-channel ambient mean of the coarsest mip (lane-broadcastable column)."""
    chan = jnp.dot(sel, last_mip, preferred_element_type=jnp.float32)   # [C, P_coarse]
    return jnp.sum(chan, axis=1, keepdims=True)                          # [C, 1]


def _shade_and_loss(kd, amb_col, tgt):
    """Shade kd with the ambient column, tonemapped-L1 against all targets in one VPU pass."""
    b, c, p = tgt.shape
    kd_c = jnp.clip(kd, 0.0, 1.0)                             # [C, P]
    log_img = jnp.log(kd_c * amb_col + 1.0)                   # [C, P] (amb broadcasts on lanes)
    log_tgt = jnp.log(tgt + 1.0)                              # [B, C, P]
    err = jnp.abs(log_img[None, :, :] - log_tgt)              # single broadcast subtract
    return jnp.sum(err) * (1.0 / float(b * c * p))


# ----------------------------------------------------------------------------------
# Kernel bodies.
# ----------------------------------------------------------------------------------
def _make_fused_forward_kernel(n_levels):
    """refs = [x, K_0..K_{n-1}, sel, kd, tgt,   mip_0..mip_{n-1}, amb, loss]."""
    def kernel(*refs):
        x_ref = refs[0]
        k_refs = refs[1:1 + n_levels]
        sel_ref = refs[1 + n_levels]
        kd_ref = refs[2 + n_levels]
        tgt_ref = refs[3 + n_levels]
        mip_refs = refs[4 + n_levels:4 + 2 * n_levels]
        amb_ref = refs[4 + 2 * n_levels]
        loss_ref = refs[5 + 2 * n_levels]

        last = _mip_chain(x_ref[...], k_refs, mip_refs)
        amb = _ambient_column(sel_ref[...], last)
        amb_ref[...] = amb
        loss_ref[0, 0] = _shade_and_loss(kd_ref[...], amb, tgt_ref[...])
    return kernel


def _make_light_kernel(n_levels):
    """refs = [x, K_0..K_{n-1}, sel,   mip_0..mip_{n-1}, amb]  (build_mips standalone)."""
    def kernel(*refs):
        x_ref = refs[0]
        k_refs = refs[1:1 + n_levels]
        sel_ref = refs[1 + n_levels]
        mip_refs = refs[2 + n_levels:2 + 2 * n_levels]
        amb_ref = refs[2 + 2 * n_levels]

        last = _mip_chain(x_ref[...], k_refs, mip_refs)
        amb_ref[...] = _ambient_column(sel_ref[...], last)
    return kernel


def _shade_loss_kernel(amb_ref, kd_ref, tgt_ref, loss_ref):
    loss_ref[0, 0] = _shade_and_loss(kd_ref[...], amb_ref[...], tgt_ref[...])


# ----------------------------------------------------------------------------------
# pallas_call wrappers (single grid step; all blocks = full arrays).
# ----------------------------------------------------------------------------------
def _light_cost(n_rows, pool_mats, nchan):
    flops, byt = 0, 0
    for m in pool_mats:
        flops += 2 * n_rows * m.shape[0] * m.shape[1]          # pooling matmuls
        byt += m.size * 2 + n_rows * m.shape[1] * 4            # bf16 K in, f32 mip out
    p_last = pool_mats[-1].shape[1]
    flops += 2 * nchan * n_rows * p_last + nchan * p_last      # ambient
    byt += n_rows * pool_mats[0].shape[0] * 2                  # bf16 cubemap in
    byt += nchan * n_rows * 4 + nchan * 4                      # sel in, amb out
    return flops, byt


def _shade_cost(nchan, npix, nbatch):
    flops = 4 * (nbatch + 1) * nchan * npix
    trans = (nbatch + 1) * nchan * npix                        # logs -> EUP
    byt = (nchan + nchan * npix + nbatch * nchan * npix + 1) * 4
    return flops, trans, byt


def fused_forward(light_flat_bf16, pool_mats, sel, kd_flat, tgt):
    n_rows, p = light_flat_bf16.shape
    n_levels = len(pool_mats)
    nchan, npix = kd_flat.shape
    nbatch = tgt.shape[0]

    in_specs = [pl.BlockSpec((n_rows, p), lambda i: (0, 0))]
    for m in pool_mats:
        in_specs.append(pl.BlockSpec(m.shape, lambda i: (0, 0)))
    in_specs.append(pl.BlockSpec(sel.shape, lambda i: (0, 0)))
    in_specs.append(pl.BlockSpec((nchan, npix), lambda i: (0, 0)))
    in_specs.append(pl.BlockSpec((nbatch, nchan, npix), lambda i: (0, 0, 0)))

    out_shapes, out_specs = [], []
    for m in pool_mats:
        po = m.shape[1]
        out_shapes.append(jax.ShapeDtypeStruct((n_rows, po), jnp.float32))
        out_specs.append(pl.BlockSpec((n_rows, po), lambda i: (0, 0)))
    out_shapes.append(jax.ShapeDtypeStruct((nchan, 1), jnp.float32))        # ambient column
    out_specs.append(pl.BlockSpec((nchan, 1), lambda i: (0, 0)))
    out_shapes.append(jax.ShapeDtypeStruct((1, 1), jnp.float32))            # scalar loss
    out_specs.append(pl.BlockSpec(memory_space=pltpu.SMEM))

    lf, lb = _light_cost(n_rows, pool_mats, nchan)
    sf, st, sb = _shade_cost(nchan, npix, nbatch)

    return pl.pallas_call(
        _make_fused_forward_kernel(n_levels),
        out_shape=tuple(out_shapes),
        grid=(1,),
        in_specs=in_specs,
        out_specs=tuple(out_specs),
        compiler_params=pltpu.CompilerParams(dimension_semantics=("arbitrary",)),
        cost_estimate=pl.CostEstimate(flops=lf + sf, transcendentals=st,
                                      bytes_accessed=lb + sb),
    )(light_flat_bf16, *pool_mats, sel, kd_flat, tgt)


def light_mips_and_amb(light_flat_bf16, pool_mats, sel):
    n_rows, p = light_flat_bf16.shape
    n_levels = len(pool_mats)
    nchan = sel.shape[0]

    in_specs = [pl.BlockSpec((n_rows, p), lambda i: (0, 0))]
    for m in pool_mats:
        in_specs.append(pl.BlockSpec(m.shape, lambda i: (0, 0)))
    in_specs.append(pl.BlockSpec(sel.shape, lambda i: (0, 0)))

    out_shapes, out_specs = [], []
    for m in pool_mats:
        po = m.shape[1]
        out_shapes.append(jax.ShapeDtypeStruct((n_rows, po), jnp.float32))
        out_specs.append(pl.BlockSpec((n_rows, po), lambda i: (0, 0)))
    out_shapes.append(jax.ShapeDtypeStruct((nchan, 1), jnp.float32))
    out_specs.append(pl.BlockSpec((nchan, 1), lambda i: (0, 0)))

    lf, lb = _light_cost(n_rows, pool_mats, nchan)

    return pl.pallas_call(
        _make_light_kernel(n_levels),
        out_shape=tuple(out_shapes),
        grid=(1,),
        in_specs=in_specs,
        out_specs=tuple(out_specs),
        compiler_params=pltpu.CompilerParams(dimension_semantics=("arbitrary",)),
        cost_estimate=pl.CostEstimate(flops=lf, transcendentals=0, bytes_accessed=lb),
    )(light_flat_bf16, *pool_mats, sel)


def shade_and_loss(amb_col, kd_flat, tgt):
    nchan, npix = kd_flat.shape
    nbatch = tgt.shape[0]
    sf, st, sb = _shade_cost(nchan, npix, nbatch)
    return pl.pallas_call(
        _shade_loss_kernel,
        out_shape=jax.ShapeDtypeStruct((1, 1), jnp.float32),
        grid=(1,),
        in_specs=[pl.BlockSpec((nchan, 1), lambda i: (0, 0)),
                  pl.BlockSpec((nchan, npix), lambda i: (0, 0)),
                  pl.BlockSpec((nbatch, nchan, npix), lambda i: (0, 0, 0))],
        out_specs=pl.BlockSpec(memory_space=pltpu.SMEM),
        compiler_params=pltpu.CompilerParams(dimension_semantics=("arbitrary",)),
        cost_estimate=pl.CostEstimate(flops=sf, transcendentals=st, bytes_accessed=sb),
    )(amb_col, kd_flat, tgt)


# ----------------------------------------------------------------------------------
# Jitted forward helpers (all reshapes / casts stay inside jit).
# ----------------------------------------------------------------------------------
def _reshape_mips(mips_flat, fc, w):
    mips, r = [], w
    for mf in mips_flat:
        r //= 2
        mips.append(mf.reshape(fc, r, r))
    return tuple(mips)


def _build_mips(light_base, pool_mats, sel):
    fc, h, w = light_base.shape
    outs = light_mips_and_amb(light_base.reshape(fc, h * w).astype(jnp.bfloat16),
                              pool_mats, sel)
    return _reshape_mips(outs[:-1], fc, w), outs[-1]


def _forward_with_light(light_base, kd, tgt, pool_mats, sel):
    fc, h, w = light_base.shape
    _, c, p = kd.shape
    outs = fused_forward(light_base.reshape(fc, h * w).astype(jnp.bfloat16),
                         pool_mats, sel, kd.reshape(c, p), tgt)
    mips = _reshape_mips(outs[:-2], fc, w)
    amb, loss = outs[-2], outs[-1]
    return loss[0, 0], mips, amb


def _forward_without_light(amb, kd, tgt):
    _, c, p = kd.shape
    loss = shade_and_loss(amb, kd.reshape(c, p), tgt)
    return loss[0, 0]


_build_mips_jit = jax.jit(_build_mips)
_forward_with_light_jit = jax.jit(_forward_with_light)
_forward_without_light_jit = jax.jit(_forward_without_light)


# ----------------------------------------------------------------------------------
# Trainer-equivalent glue.
# ----------------------------------------------------------------------------------
class TrainerPallas:
    def __init__(self, light_base, material_kd, optimize_light=True,
                 camera_space_light=False):
        # light_base: [6*3, H, W] env-light cubemap; material_kd: [1, 3, H*W] albedo.
        self.light_base = light_base
        self.kd = material_kd
        self.optimize_light = optimize_light
        self.camera_space_light = camera_space_light

        fc, res, _ = light_base.shape
        nchan = material_kd.shape[1]
        nfaces = fc // nchan

        # Precompute Kronecker pooling matrices (bf16 MXU operands) and the channel-
        # selection weights -- host-side numpy, done exactly once.
        mats, r = [], res
        while r > 2:
            mats.append(jnp.asarray(_kron_pool_matrix(r), dtype=jnp.bfloat16))
            r //= 2
        self.pool_mats = tuple(mats)
        self.sel = jnp.asarray(_chan_select_matrix(nfaces, nchan, r * r))   # [C, F*C] f32

        if not self.optimize_light:
            # torch.no_grad() equivalent: mips (and derived ambient) built once.
            mips, amb = _build_mips_jit(self.light_base, self.pool_mats, self.sel)
            self.mips = [self.light_base] + list(mips)
            self.amb = amb

    def build_mips(self):
        mips, amb = _build_mips_jit(self.light_base, self.pool_mats, self.sel)
        self.amb = amb
        return [self.light_base] + list(mips)

    def forward(self, target, it):
        if self.optimize_light:
            if self.camera_space_light:
                # TODO(synk): light.xfm(target['mv']) only stores the camera transform on
                # the light object in the original; no compute to port.
                pass
            # Single fused pallas_call: mip chain + ambient + shade + loss (one launch).
            loss, mips, amb = _forward_with_light_jit(
                self.light_base, self.kd, target['img'], self.pool_mats, self.sel)
            self.mips = [self.light_base] + list(mips)   # mirror light.build_mips() side effect
            self.amb = amb
        else:
            loss = _forward_without_light_jit(self.amb, self.kd, target['img'])
        # TODO(synk): geometry.tick() rasterization (nvdiffrast) and SDS guidance (diffusion
        # model + text_z) have no Pallas equivalent; the shaded-image tonemapped-L1 image
        # loss above is the portable compute.
        return loss


if __name__ == "__main__":
    key = jax.random.PRNGKey(0)
    k1, k2, k3 = jax.random.split(key, 3)

    F, C, RES = 6, 3, 16          # cubemap: 6 faces, 3 channels, 16x16
    B, H, W = 2, 16, 16           # target images

    light_base = jax.random.uniform(k1, (F * C, RES, RES), jnp.float32)      # [18,16,16]
    material_kd = jax.random.uniform(k2, (1, C, H * W), jnp.float32)         # [1,3,256]
    target_img = jax.random.uniform(k3, (B, C, H * W), jnp.float32,
                                    minval=0.05, maxval=1.0)                 # [2,3,256]
    mv = jnp.broadcast_to(jnp.eye(4, dtype=jnp.float32), (B, 4, 4))          # unused (TODO)
    target = {"img": target_img, "mv": mv}

    # Path 1: optimize_light=True -> one fused kernel launch per step.
    trainer = TrainerPallas(light_base, material_kd,
                            optimize_light=True, camera_space_light=False)
    loss = trainer.forward(target, it=0)
    jax.block_until_ready(loss)
    assert jnp.isfinite(loss)

    # Path 2: optimize_light=False -> mips built once at init, shade+loss kernel per step.
    trainer_fixed = TrainerPallas(light_base, material_kd,
                                  optimize_light=False, camera_space_light=False)
    loss2 = trainer_fixed.forward(target, it=0)
    jax.block_until_ready(loss2)
    assert jnp.isfinite(loss2)

    print("KERNEL_OK")
</pallas_src>

<mosaic_0001>
module attributes {stable_mosaic.version = 11 : i64} {
  func.func @kernel(%arg0: i32, %arg1: memref<18x256xbf16, #tpu.memory_space<vmem>>, %arg2: memref<256x64xbf16, #tpu.memory_space<vmem>>, %arg3: memref<64x16xbf16, #tpu.memory_space<vmem>>, %arg4: memref<16x4xbf16, #tpu.memory_space<vmem>>, %arg5: memref<3x18xf32, #tpu.memory_space<vmem>>, %arg6: memref<3x256xf32, #tpu.memory_space<vmem>>, %arg7: memref<2x3x256xf32, #tpu.memory_space<vmem>>, %arg8: memref<18x64xf32, #tpu.memory_space<vmem>>, %arg9: memref<18x16xf32, #tpu.memory_space<vmem>>, %arg10: memref<18x4xf32, #tpu.memory_space<vmem>>, %arg11: memref<3x1xf32, #tpu.memory_space<vmem>>, %arg12: memref<1x1xf32, #tpu.memory_space<smem>>) attributes {dimension_semantics = [#tpu.dimension_semantics<arbitrary>], iteration_bounds = array<i64: 1>, scalar_prefetch = 0 : i64, scratch_operands = 0 : i64, tpu.core_type = #tpu.core_type<tc>, window_params = [{pipeline_mode = #tpu.pipeline_mode<synchronous>, transform_indices = @transform_0, window_bounds = array<i64: 18, 256>}, {pipeline_mode = #tpu.pipeline_mode<synchronous>, transform_indices = @transform_1, window_bounds = array<i64: 256, 64>}, {pipeline_mode = #tpu.pipeline_mode<synchronous>, transform_indices = @transform_2, window_bounds = array<i64: 64, 16>}, {pipeline_mode = #tpu.pipeline_mode<synchronous>, transform_indices = @transform_3, window_bounds = array<i64: 16, 4>}, {pipeline_mode = #tpu.pipeline_mode<synchronous>, transform_indices = @transform_4, window_bounds = array<i64: 3, 18>}, {pipeline_mode = #tpu.pipeline_mode<synchronous>, transform_indices = @transform_5, window_bounds = array<i64: 3, 256>}, {pipeline_mode = #tpu.pipeline_mode<synchronous>, transform_indices = @transform_6, window_bounds = array<i64: 2, 3, 256>}, {pipeline_mode = #tpu.pipeline_mode<synchronous>, transform_indices = @transform_7, window_bounds = array<i64: 18, 64>}, {pipeline_mode = #tpu.pipeline_mode<synchronous>, transform_indices = @transform_8, window_bounds = array<i64: 18, 16>}, {pipeline_mode = #tpu.pipeline_mode<synchronous>, transform_indices = @transform_9, window_bounds = array<i64: 18, 4>}, {pipeline_mode = #tpu.pipeline_mode<synchronous>, transform_indices = @transform_10, window_bounds = array<i64: 3, 1>}, {transform_indices = @transform_11, window_bounds = array<i64: 1, 1>}]} {
    %c0 = arith.constant 0 : index
    %c0_0 = arith.constant 0 : index
    %0 = vector.load %arg1[%c0, %c0_0] : memref<18x256xbf16, #tpu.memory_space<vmem>>, vector<18x256xbf16>
    %c0_1 = arith.constant 0 : index
    %c0_2 = arith.constant 0 : index
    %1 = vector.load %arg2[%c0_1, %c0_2] : memref<256x64xbf16, #tpu.memory_space<vmem>>, vector<256x64xbf16>
    %cst = arith.constant dense<0.000000e+00> : vector<18x64xf32>
    %2 = tpu.matmul %0, %1, %cst {dimension_numbers = #tpu.dot_dimension_numbers<[1], [0], [0], [1], [0, 0, 1, 1], [], []>} : vector<18x256xbf16>, vector<256x64xbf16>, vector<18x64xf32> -> vector<18x64xf32>
    %c0_3 = arith.constant 0 : index
    %c0_4 = arith.constant 0 : index
    %3 = vector.load %arg8[%c0_3, %c0_4] : memref<18x64xf32, #tpu.memory_space<vmem>>, vector<18x64xf32>
    tpu.vector_store %arg8[%c0_3, %c0_4], %2 {strides = array<i32>} : memref<18x64xf32, #tpu.memory_space<vmem>>, vector<18x64xf32>,
    %4 = arith.truncf %2 : vector<18x64xf32> to vector<18x64xbf16>
    %c0_5 = arith.constant 0 : index
    %c0_6 = arith.constant 0 : index
    %5 = vector.load %arg3[%c0_5, %c0_6] : memref<64x16xbf16, #tpu.memory_space<vmem>>, vector<64x16xbf16>
    %cst_7 = arith.constant dense<0.000000e+00> : vector<18x16xf32>
    %6 = tpu.matmul %4, %5, %cst_7 {dimension_numbers = #tpu.dot_dimension_numbers<[1], [0], [0], [1], [0, 0, 1, 1], [], []>} : vector<18x64xbf16>, vector<64x16xbf16>, vector<18x16xf32> -> vector<18x16xf32>
    %c0_8 = arith.constant 0 : index
    %c0_9 = arith.constant 0 : index
    %7 = vector.load %arg9[%c0_8, %c0_9] : memref<18x16xf32, #tpu.memory_space<vmem>>, vector<18x16xf32>
    tpu.vector_store %arg9[%c0_8, %c0_9], %6 {strides = array<i32>} : memref<18x16xf32, #tpu.memory_space<vmem>>, vector<18x16xf32>,
    %8 = arith.truncf %6 : vector<18x16xf32> to vector<18x16xbf16>
    %c0_10 = arith.constant 0 : index
    %c0_11 = arith.constant 0 : index
    %9 = vector.load %arg4[%c0_10, %c0_11] : memref<16x4xbf16, #tpu.memory_space<vmem>>, vector<16x4xbf16>
    %cst_12 = arith.constant dense<0.000000e+00> : vector<18x4xf32>
    %10 = tpu.matmul %8, %9, %cst_12 {dimension_numbers = #tpu.dot_dimension_numbers<[1], [0], [0], [1], [0, 0, 1, 1], [], []>} : vector<18x16xbf16>, vector<16x4xbf16>, vector<18x4xf32> -> vector<18x4xf32>
    %c0_13 = arith.constant 0 : index
    %c0_14 = arith.constant 0 : index
    %11 = vector.load %arg10[%c0_13, %c0_14] : memref<18x4xf32, #tpu.memory_space<vmem>>, vector<18x4xf32>
    tpu.vector_store %arg10[%c0_13, %c0_14], %10 {strides = array<i32>} : memref<18x4xf32, #tpu.memory_space<vmem>>, vector<18x4xf32>,
    %c0_15 = arith.constant 0 : index
    %c0_16 = arith.constant 0 : index
    %12 = vector.load %arg5[%c0_15, %c0_16] : memref<3x18xf32, #tpu.memory_space<vmem>>, vector<3x18xf32>
    %cst_17 = arith.constant dense<0.000000e+00> : vector<3x4xf32>
    %13 = tpu.matmul %12, %10, %cst_17 {dimension_numbers = #tpu.dot_dimension_numbers<[1], [0], [0], [1], [0, 0, 1, 1], [], []>} : vector<3x18xf32>, vector<18x4xf32>, vector<3x4xf32> -> vector<3x4xf32>
    %cst_18 = arith.constant dense<0.000000e+00> : vector<3xf32>
    %14 = vector.multi_reduction <add>, %13, %cst_18 [1] : vector<3x4xf32> to vector<3xf32>
    %15 = vector.shape_cast %14 : vector<3xf32> to vector<3x1xf32>
    %c0_19 = arith.constant 0 : index
    %c0_20 = arith.constant 0 : index
    %16 = vector.load %arg11[%c0_19, %c0_20] : memref<3x1xf32, #tpu.memory_space<vmem>>, vector<3x1xf32>
    tpu.vector_store %arg11[%c0_19, %c0_20], %15 {strides = array<i32>} : memref<3x1xf32, #tpu.memory_space<vmem>>, vector<3x1xf32>,
    %c0_21 = arith.constant 0 : index
    %c0_22 = arith.constant 0 : index
    %17 = vector.load %arg6[%c0_21, %c0_22] : memref<3x256xf32, #tpu.memory_space<vmem>>, vector<3x256xf32>
    %c0_23 = arith.constant 0 : index
    %c0_24 = arith.constant 0 : index
    %c0_25 = arith.constant 0 : index
    %18 = vector.load %arg7[%c0_23, %c0_24, %c0_25] : memref<2x3x256xf32, #tpu.memory_space<vmem>>, vector<2x3x256xf32>
    %cst_26 = arith.constant 0.000000e+00 : f32
    %cst_27 = arith.constant 1.000000e+00 : f32
    %19 = vector.broadcast %cst_26 : f32 to vector<3x256xf32>
    %20 = arith.maximumf %19, %17 : vector<3x256xf32>
    %21 = vector.broadcast %cst_27 : f32 to vector<3x256xf32>
    %22 = arith.minimumf %21, %20 : vector<3x256xf32>
    %23 = vector.broadcast %15 : vector<3x1xf32> to vector<3x256xf32>
    %24 = arith.mulf %22, %23 : vector<3x256xf32>
    %cst_28 = arith.constant 1.000000e+00 : f32
    %25 = vector.broadcast %cst_28 : f32 to vector<3x256xf32>
    %26 = arith.addf %24, %25 : vector<3x256xf32>
    %27 = math.log %26 : vector<3x256xf32>
    %cst_29 = arith.constant 1.000000e+00 : f32
    %28 = vector.broadcast %cst_29 : f32 to vector<2x3x256xf32>
    %29 = arith.addf %18, %28 : vector<2x3x256xf32>
    %30 = math.log %29 : vector<2x3x256xf32>
    %31 = vector.shape_cast %27 : vector<3x256xf32> to vector<1x3x256xf32>
    %32 = vector.broadcast %31 : vector<1x3x256xf32> to vector<2x3x256xf32>
    %33 = arith.subf %32, %30 : vector<2x3x256xf32>
    %34 = math.absf %33 : vector<2x3x256xf32>
    %35 = vector.shape_cast %34 : vector<2x3x256xf32> to vector<1x2x3x256xf32>
    %cst_30 = arith.constant dense<0.000000e+00> : vector<1xf32>
    %36 = vector.multi_reduction <add>, %35, %cst_30 [1, 2, 3] : vector<1x2x3x256xf32> to vector<1xf32>
    %37 = vector.shape_cast %36 : vector<1xf32> to vector<1x1x1x1xf32>
    %38 = vector.extract %37[0, 0, 0, 0] : f32 from vector<1x1x1x1xf32>
    %cst_31 = arith.constant 6.51041686E-4 : f32
    %39 = arith.mulf %38, %cst_31 : f32
    %c0_32 = arith.constant 0 : index
    %c0_33 = arith.constant 0 : index
    %40 = memref.load %arg12[%c0_32, %c0_33] : memref<1x1xf32, #tpu.memory_space<smem>>
    memref.store %39, %arg12[%c0_32, %c0_33] : memref<1x1xf32, #tpu.memory_space<smem>>
    return
  }
  func.func @transform_0(%arg0: i32) -> (i32, i32) {
    %c0_i32 = arith.constant 0 : i32
    %c0_i32_0 = arith.constant 0 : i32
    %c0_i32_1 = arith.constant 0 : i32
    return %c0_i32, %c0_i32_0 : i32, i32
  }
  func.func @transform_1(%arg0: i32) -> (i32, i32) {
    %c0_i32 = arith.constant 0 : i32
    %c0_i32_0 = arith.constant 0 : i32
    %c0_i32_1 = arith.constant 0 : i32
    return %c0_i32, %c0_i32_0 : i32, i32
  }
  func.func @transform_2(%arg0: i32) -> (i32, i32) {
    %c0_i32 = arith.constant 0 : i32
    %c0_i32_0 = arith.constant 0 : i32
    %c0_i32_1 = arith.constant 0 : i32
    return %c0_i32, %c0_i32_0 : i32, i32
  }
  func.func @transform_3(%arg0: i32) -> (i32, i32) {
    %c0_i32 = arith.constant 0 : i32
    %c0_i32_0 = arith.constant 0 : i32
    %c0_i32_1 = arith.constant 0 : i32
    return %c0_i32, %c0_i32_0 : i32, i32
  }
  func.func @transform_4(%arg0: i32) -> (i32, i32) {
    %c0_i32 = arith.constant 0 : i32
    %c0_i32_0 = arith.constant 0 : i32
    %c0_i32_1 = arith.constant 0 : i32
    return %c0_i32, %c0_i32_0 : i32, i32
  }
  func.func @transform_5(%arg0: i32) -> (i32, i32) {
    %c0_i32 = arith.constant 0 : i32
    %c0_i32_0 = arith.constant 0 : i32
    %c0_i32_1 = arith.constant 0 : i32
    return %c0_i32, %c0_i32_0 : i32, i32
  }
  func.func @transform_6(%arg0: i32) -> (i32, i32, i32) {
    %c0_i32 = arith.constant 0 : i32
    %c0_i32_0 = arith.constant 0 : i32
    %c0_i32_1 = arith.constant 0 : i32
    %c0_i32_2 = arith.constant 0 : i32
    return %c0_i32, %c0_i32_0, %c0_i32_1 : i32, i32, i32
  }
  func.func @transform_7(%arg0: i32) -> (i32, i32) {
    %c0_i32 = arith.constant 0 : i32
    %c0_i32_0 = arith.constant 0 : i32
    %c0_i32_1 = arith.constant 0 : i32
    return %c0_i32, %c0_i32_0 : i32, i32
  }
  func.func @transform_8(%arg0: i32) -> (i32, i32) {
    %c0_i32 = arith.constant 0 : i32
    %c0_i32_0 = arith.constant 0 : i32
    %c0_i32_1 = arith.constant 0 : i32
    return %c0_i32, %c0_i32_0 : i32, i32
  }
  func.func @transform_9(%arg0: i32) -> (i32, i32) {
    %c0_i32 = arith.constant 0 : i32
    %c0_i32_0 = arith.constant 0 : i32
    %c0_i32_1 = arith.constant 0 : i32
    return %c0_i32, %c0_i32_0 : i32, i32
  }
  func.func @transform_10(%arg0: i32) -> (i32, i32) {
    %c0_i32 = arith.constant 0 : i32
    %c0_i32_0 = arith.constant 0 : i32
    %c0_i32_1 = arith.constant 0 : i32
    return %c0_i32, %c0_i32_0 : i32, i32
  }
  func.func @transform_11(%arg0: i32) -> (i32, i32) {
    %c0_i32 = arith.constant 0 : i32
    %c0_i32_0 = arith.constant 0 : i32
    %c0_i32_1 = arith.constant 0 : i32
    return %c0_i32, %c0_i32_0 : i32, i32
  }
}

</mosaic_0001>

<llo_original>
// kernel: _forward_with_light.1
$region0: #{_forward_with_light.1}
  #allocation0 [shape = 'u32[]', space=smem, size = 0x4, offset = 0x4, fixed_abs, tag = 'smem constant byte address 0x4 - core index']
  #allocation1 [shape = 'u32[72,128]{1,0:T(1,128)}', space=vmem, size = 0x9000, scoped, tag = 'internal scratch']
  %s0 = inlined_call_operand.vmem [shape: bf16[18,256], index: 0, kind: input, shape index: {}]
  %s1 = inlined_call_operand.vmem [shape: bf16[256,64], index: 1, kind: input, shape index: {}]
  %s2 = inlined_call_operand.vmem [shape: bf16[64,16], index: 2, kind: input, shape index: {}]
  %s3 = inlined_call_operand.vmem [shape: bf16[16,4], index: 3, kind: input, shape index: {}]
  %s4 = inlined_call_operand.vmem [shape: f32[3,18], index: 4, kind: input, shape index: {}]
  %s5 = inlined_call_operand.vmem [shape: f32[3,256], index: 5, kind: input, shape index: {}]
  %s6 = inlined_call_operand.vmem [shape: f32[2,3,256], index: 6, kind: input, shape index: {}]
  %s7 = inlined_call_operand.vmem [shape: f32[18,64], index: 7, kind: output, shape index: {0}]
  %s8 = inlined_call_operand.vmem [shape: f32[18,16], index: 8, kind: output, shape index: {1}]
  %s9 = inlined_call_operand.vmem [shape: f32[18,4], index: 9, kind: output, shape index: {2}]
  %s10 = inlined_call_operand.vmem [shape: f32[3,1], index: 10, kind: output, shape index: {3}]
  %s11 = inlined_call_operand.hbm [shape: f32[1,1], index: 11, kind: output, shape index: {4}]
  %12 = xla_tuple %s7, %s8, %s9, %s10, %s11
  %s13 = sld [smem:[#allocation0]]
  $region70: #{_forward_with_light.1} parent=0
    _
  %s15 = ssub.s32 1, %s13
  %s16 = scalar_select 0, %s15, %s13
  $region1: #{_forward_with_light.1} parent=0
    #allocation2 [shape = 'u8[512]{0}', space=smem, size = 0x200, scoped, tag = 'output window, operand 4, single buffered']
    #allocation3 [shape = 's32[1]{0}', space=sflag, size = 0x4, scoped, tag = 'scoped memory for _forward_with_light.1']
    %17 = vsyncpa [#allocation3], 0
    // Predicated region
    $region2: #{_forward_with_light.1} parent=1 // pred_check
      _
    $region3: #{_forward_with_light.1} parent=1 // pred_check_branch
      %19 = sbr.rel (0) target = $region5
    $region4: #{_forward_with_light.1} parent=1 // pred_region
      _
    $region5: #{_forward_with_light.1} parent=1 // pred_fallthru
      _
    // Predicated region
    $region6: #{_forward_with_light.1} parent=1 // pred_check
      _
    $region7: #{_forward_with_light.1} parent=1 // pred_check_branch
      %21 = sbr.rel (0) target = $region9
    $region8: #{_forward_with_light.1} parent=1 // pred_region
      _
    $region9: #{_forward_with_light.1} parent=1 // pred_fallthru
      _
    // Predicated region
    $region10: #{_forward_with_light.1} parent=1 // pred_check
      _
    $region11: #{_forward_with_light.1} parent=1 // pred_check_branch
      %23 = sbr.rel (0) target = $region13
    $region12: #{_forward_with_light.1} parent=1 // pred_region
      _
    $region13: #{_forward_with_light.1} parent=1 // pred_fallthru
      _
    // Predicated region
    $region14: #{_forward_with_light.1} parent=1 // pred_check
      _
    $region15: #{_forward_with_light.1} parent=1 // pred_check_branch
      %25 = sbr.rel (0) target = $region17
    $region16: #{_forward_with_light.1} parent=1 // pred_region
      _
    $region17: #{_forward_with_light.1} parent=1 // pred_fallthru
      _
    // Predicated region
    $region18: #{_forward_with_light.1} parent=1 // pred_check
      _
    $region19: #{_forward_with_light.1} parent=1 // pred_check_branch
      %27 = sbr.rel (0) target = $region21
    $region20: #{_forward_with_light.1} parent=1 // pred_region
      _
    $region21: #{_forward_with_light.1} parent=1 // pred_fallthru
      _
    // Predicated region
    $region22: #{_forward_with_light.1} parent=1 // pred_check
      _
    $region23: #{_forward_with_light.1} parent=1 // pred_check_branch
      %29 = sbr.rel (0) target = $region25
    $region24: #{_forward_with_light.1} parent=1 // pred_region
      _
    $region25: #{_forward_with_light.1} parent=1 // pred_fallthru
      _
    // Predicated region
    $region26: #{_forward_with_light.1} parent=1 // pred_check
      _
    $region27: #{_forward_with_light.1} parent=1 // pred_check_branch
      %31 = sbr.rel (0) target = $region29
    $region28: #{_forward_with_light.1} parent=1 // pred_region
      _
    $region29: #{_forward_with_light.1} parent=1 // pred_fallthru
      _
    %v33 = vld [vmem:[%s0] sm:$0xff]
    %v34 = vld [vmem:[%s0 + $0x8] sm:$0xff]
    %v35 = vld [vmem:[%s0 + $0x10] sm:$0x11]
    %v36 = vld [vmem:[%s1] sm:$0xf]
    %v37 = vld [vmem:[%s1 + $0x4] sm:$0xf]
    %v38 = vld [vmem:[%s1 + $0x8] sm:$0xf]
    %v39 = vld [vmem:[%s1 + $0xc] sm:$0xf]
    %v40 = vld [vmem:[%s1 + $0x10] sm:$0xf]
    %v41 = vld [vmem:[%s1 + $0x14] sm:$0xf]
    %v42 = vld [vmem:[%s1 + $0x18] sm:$0xf]
    %v43 = vld [vmem:[%s1 + $0x1c] sm:$0xf]
    %v44 = vld [vmem:[%s1 + $0x20] sm:$0xf]
    %v45 = vld [vmem:[%s1 + $0x24] sm:$0xf]
    %v46 = vld [vmem:[%s1 + $0x28] sm:$0xf]
    %v47 = vld [vmem:[%s1 + $0x2c] sm:$0xf]
    %v48 = vld [vmem:[%s1 + $0x30] sm:$0xf]
    %v49 = vld [vmem:[%s1 + $0x34] sm:$0xf]
    %v50 = vld [vmem:[%s1 + $0x38] sm:$0xf]
    %v51 = vld [vmem:[%s1 + $0x3c] sm:$0xf]
    %v52 = vld [vmem:[%s1 + $0x40] sm:$0xf]
    %v53 = vld [vmem:[%s1 + $0x44] sm:$0xf]
    %v54 = vld [vmem:[%s1 + $0x48] sm:$0xf]
    %v55 = vld [vmem:[%s1 + $0x4c] sm:$0xf]
    %v56 = vld [vmem:[%s1 + $0x50] sm:$0xf]
    %v57 = vld [vmem:[%s1 + $0x54] sm:$0xf]
    %v58 = vld [vmem:[%s1 + $0x58] sm:$0xf]
    %v59 = vld [vmem:[%s1 + $0x5c] sm:$0xf]
    %v60 = vld [vmem:[%s1 + $0x60] sm:$0xf]
    %v61 = vld [vmem:[%s1 + $0x64] sm:$0xf]
    %v62 = vld [vmem:[%s1 + $0x68] sm:$0xf]
    %v63 = vld [vmem:[%s1 + $0x6c] sm:$0xf]
    %v64 = vld [vmem:[%s1 + $0x70] sm:$0xf]
    %v65 = vld [vmem:[%s1 + $0x74] sm:$0xf]
    %v66 = vld [vmem:[%s1 + $0x78] sm:$0xf]
    %v67 = vld [vmem:[%s1 + $0x7c] sm:$0xf]
    %v71 = vunpack.c.l.b16 %v33
    %v72 = vunpack.c.h.b16 %v33
    %v73 = vunpack.c.l.b16 %v34
    %v74 = vunpack.c.h.b16 %v34
    %v75 = vunpack.c.l.b16 %v35
    %v76 = vunpack.c.h.b16 %v35
    %v77 = vpack.c.b16 %v73, %v71
    %v78 = vpack.c.b16 %v74, %v72
    %v79 = vpack.c.b16 %v75, %v75
    %v80 = vpack.c.b16 %v76, %v76
    %v117 = vunpack.c.l.b16 %v36
    %v118 = vunpack.c.l.b16 %v37
    %v119 = vunpack.c.l.b16 %v38
    %v120 = vunpack.c.l.b16 %v39
    %v121 = vunpack.c.l.b16 %v40
    %v122 = vunpack.c.l.b16 %v41
    %v123 = vunpack.c.l.b16 %v42
    %v124 = vunpack.c.l.b16 %v43
    %v125 = vunpack.c.l.b16 %v44
    %v126 = vunpack.c.l.b16 %v45
    %v127 = vunpack.c.l.b16 %v46
    %v128 = vunpack.c.l.b16 %v47
    %v129 = vunpack.c.l.b16 %v48
    %v130 = vunpack.c.l.b16 %v49
    %v131 = vunpack.c.l.b16 %v50
    %v132 = vunpack.c.l.b16 %v51
    %v133 = vunpack.c.l.b16 %v52
    %v134 = vunpack.c.l.b16 %v53
    %v135 = vunpack.c.l.b16 %v54
    %v136 = vunpack.c.l.b16 %v55
    %v137 = vunpack.c.l.b16 %v56
    %v138 = vunpack.c.l.b16 %v57
    %v139 = vunpack.c.l.b16 %v58
    %v140 = vunpack.c.l.b16 %v59
    %v141 = vunpack.c.l.b16 %v60
    %v142 = vunpack.c.l.b16 %v61
    %v143 = vunpack.c.l.b16 %v62
    %v144 = vunpack.c.l.b16 %v63
    %v145 = vunpack.c.l.b16 %v64
    %v146 = vunpack.c.l.b16 %v65
    %v147 = vunpack.c.l.b16 %v66
    %v148 = vunpack.c.l.b16 %v67
    %v149 = vpack.c.b16 %v118, %v117
    %v150 = vpack.c.b16 %v120, %v119
    %v151 = vpack.c.b16 %v122, %v121
    %v152 = vpack.c.b16 %v124, %v123
    %v153 = vpack.c.b16 %v126, %v125
    %v154 = vpack.c.b16 %v128, %v127
    %v155 = vpack.c.b16 %v130, %v129
    %v156 = vpack.c.b16 %v132, %v131
    %v157 = vpack.c.b16 %v134, %v133
    %v158 = vpack.c.b16 %v136, %v135
    %v159 = vpack.c.b16 %v138, %v137
    %v160 = vpack.c.b16 %v140, %v139
    %v161 = vpack.c.b16 %v142, %v141
    %v162 = vpack.c.b16 %v144, %v143
    %v163 = vpack.c.b16 %v146, %v145
    %v164 = vpack.c.b16 %v148, %v147
    %181 = vmatpush.bf16.msra.mxu0 %v156
    %182 = vmatpush.bf16.msra.mxu0 %v155
    %183 = vmatpush.bf16.msra.mxu0 %v154
    %184 = vmatpush.bf16.msra.mxu0 %v153
    %185 = vmatpush.bf16.msra.mxu0 %v152
    %186 = vmatpush.bf16.msra.mxu0 %v151
    %187 = vmatpush.bf16.msra.mxu0 %v150
    %188 = vmatpush.bf16.msra.mxu0 %v149
    %189 = vmatmul.bf16.gmra.mxu0 %v77
    %v190 = vpop.f32.mrf.mxu0
    %v191 = vadd.f32 0.0, %v190
    %v192 = vpop.f32.mrf.mxu0
    %v193 = vadd.f32 0.0, %v192
    %194 = vmatmul.bf16.gmra.mxu0 %v79
    %v195 = vpop.f32.mrf.mxu0
    %v196 = vadd.f32 0.0, %v195
    %v197 = vpop.f32.mrf.mxu0
    %198 = vdwg.mxu0
    %199 = vmatpush.bf16.msra.mxu0 %v164
    %200 = vmatpush.bf16.msra.mxu0 %v163
    %201 = vmatpush.bf16.msra.mxu0 %v162
    %202 = vmatpush.bf16.msra.mxu0 %v161
    %203 = vmatpush.bf16.msra.mxu0 %v160
    %204 = vmatpush.bf16.msra.mxu0 %v159
    %205 = vmatpush.bf16.msra.mxu0 %v158
    %206 = vmatpush.bf16.msra.mxu0 %v157
    %207 = vmatmul.bf16.gmra.mxu0 %v78
    %v208 = vpop.f32.mrf.mxu0
    %v209 = vadd.f32 %v191, %v208
    %v210 = vpop.f32.mrf.mxu0
    %v211 = vadd.f32 %v193, %v210
    %212 = vmatmul.bf16.gmra.mxu0 %v80
    %v213 = vpop.f32.mrf.mxu0
    %v214 = vadd.f32 %v196, %v213
    %v215 = vpop.f32.mrf.mxu0
    %216 = vdwg.mxu0
    %vm217 = vcmask 523264
    %218 = vst.msk [vmem:[%s7] sm:$0xff] %vm217, %v209
    %219 = vst.msk [vmem:[%s7 + $0x8] sm:$0xff] %vm217, %v211
    %vm220 = vcmask 517120
    %221 = vst.msk [vmem:[%s7 + $0x10] sm:$0x3] %vm220, %v214
    %v222 = vpack.c.bf16 %v211, %v209
    %v223 = vpack.c.bf16 %v214, %v214
    %v224 = vld [vmem:[%s2] sm:$0xf]
    %v225 = vld [vmem:[%s2 + $0x4] sm:$0xf]
    %v226 = vld [vmem:[%s2 + $0x8] sm:$0xf]
    %v227 = vld [vmem:[%s2 + $0xc] sm:$0xf]
    %v228 = vld [vmem:[%s2 + $0x10] sm:$0xf]
    %v229 = vld [vmem:[%s2 + $0x14] sm:$0xf]
    %v230 = vld [vmem:[%s2 + $0x18] sm:$0xf]
    %v231 = vld [vmem:[%s2 + $0x1c] sm:$0xf]
    %v240 = vunpack.c.l.b16 %v224
    %v241 = vunpack.c.l.b16 %v225
    %v242 = vunpack.c.l.b16 %v226
    %v243 = vunpack.c.l.b16 %v227
    %v244 = vunpack.c.l.b16 %v228
    %v245 = vunpack.c.l.b16 %v229
    %v246 = vunpack.c.l.b16 %v230
    %v247 = vunpack.c.l.b16 %v231
    %v248 = vpack.c.b16 %v241, %v240
    %v249 = vpack.c.b16 %v243, %v242
    %v250 = vpack.c.b16 %v245, %v244
    %v251 = vpack.c.b16 %v247, %v246
    %v257 = vsel %vm217, %v222, 0
    %v260 = vsel %vm217, %v223, 0
    %262 = vmatpush.bf16.msra.mxu0 0
    %263 = vmatpush.bf16.msra.mxu0 0
    %264 = vmatpush.bf16.msra.mxu0 0
    %265 = vmatpush.bf16.msra.mxu0 0
    %266 = vmatpush.bf16.msra.mxu0 %v251
    %267 = vmatpush.bf16.msra.mxu0 %v250
    %268 = vmatpush.bf16.msra.mxu0 %v249
    %269 = vmatpush.bf16.msra.mxu0 %v248
    %270 = vmatmul.bf16.gmra.mxu0 %v257
    %v271 = vpop.f32.mrf.mxu0
    %v272 = vadd.f32 0.0, %v271
    %v273 = vpop.f32.mrf.mxu0
    %v274 = vadd.f32 0.0, %v273
    %275 = vmatmul.bf16.gmra.mxu0 %v260
    %v276 = vpop.f32.mrf.mxu0
    %v277 = vadd.f32 0.0, %v276
    %v278 = vpop.f32.mrf.mxu0
    %279 = vdwg.mxu0
    %vm280 = vcmask 130048
    %281 = vst.msk [vmem:[%s8] sm:$0xff] %vm280, %v272
    %282 = vst.msk [vmem:[%s8 + $0x8] sm:$0xff] %vm280, %v274
    %vm283 = vcmask 123904
    %284 = vst.msk [vmem:[%s8 + $0x10] sm:$0x3] %vm283, %v277
    %v285 = vpack.c.bf16 %v274, %v272
    %v286 = vpack.c.bf16 %v277, %v277
    %v287 = vld [vmem:[%s3] sm:$0xf]
    %v288 = vld [vmem:[%s3 + $0x4] sm:$0xf]
    %v291 = vunpack.c.l.b16 %v287
    %v292 = vunpack.c.l.b16 %v288
    %v293 = vpack.c.b16 %v292, %v291
    %v296 = vsel %vm280, %v285, 0
    %v299 = vsel %vm280, %v286, 0
    %301 = vmatpush.bf16.msra.mxu0 0
    %302 = vmatpush.bf16.msra.mxu0 0
    %303 = vmatpush.bf16.msra.mxu0 0
    %304 = vmatpush.bf16.msra.mxu0 0
    %305 = vmatpush.bf16.msra.mxu0 0
    %306 = vmatpush.bf16.msra.mxu0 0
    %307 = vmatpush.bf16.msra.mxu0 0
    %308 = vmatpush.bf16.msra.mxu0 %v293
    %309 = vmatmul.bf16.gmra.mxu0 %v296
    %v310 = vpop.f32.mrf.mxu0
    %v311 = vadd.f32 0.0, %v310
    %v312 = vpop.f32.mrf.mxu0
    %v313 = vadd.f32 0.0, %v312
    %314 = vmatmul.bf16.gmra.mxu0 %v299
    %v315 = vpop.f32.mrf.mxu0
    %v316 = vadd.f32 0.0, %v315
    %v317 = vpop.f32.mrf.mxu0
    %318 = vdwg.mxu0
    %vm319 = vcmask 31744
    %320 = vst.msk [vmem:[%s9] sm:$0xff] %vm319, %v311
    %321 = vst.msk [vmem:[%s9 + $0x8] sm:$0xff] %vm319, %v313
    %vm322 = vcmask 25600
    %323 = vst.msk [vmem:[%s9 + $0x10] sm:$0x3] %vm322, %v316
    %v324 = vld [vmem:[%s4] sm:$0x7]
    %vm325 = vcmask 146432
    %v327 = vsel %vm325, %v324, 0
    %vm329 = vcmask 1041408
    %v331 = vsel %vm329, %v316, 0
    %333 = vmatpush.msra.mxu0 0.0
    %334 = vmatpush.msra.mxu0 0.0
    %335 = vmatpush.msra.mxu0 0.0
    %336 = vmatpush.msra.mxu0 0.0
    %337 = vmatpush.msra.mxu0 0.0
    %338 = vmatpush.msra.mxu0 0.0
    %339 = vmatpush.msra.mxu0 0.0
    %340 = vmatpush.msra.mxu0 0.0
    %341 = vmatpush.msra.mxu0 0.0
    %342 = vmatpush.msra.mxu0 0.0
    %343 = vmatpush.msra.mxu0 0.0
    %344 = vmatpush.msra.mxu0 0.0
    %345 = vmatpush.msra.mxu0 0.0
    %346 = vmatpush.msra.mxu0 %v331
    %347 = vmatpush.msra.mxu0 %v313
    %348 = vmatpush.msra.mxu0 %v311
    %349 = vmatmul.f32.gmra.mxu0 %v327
    %v350 = vpop.f32.mrf.mxu0
    %v351 = vadd.f32 0.0, %v350
    %352 = vdwg.mxu0
    %vm353 = vcmask 26624
    %v354 = vsel %vm353, %v351, 0.0
    %355 = vadd.xlane.f32.xlu0 %v354
    %v356 = vpop.xlane.xlu0 %355
    %vm357 = vcmask 2048
    %358 = vst.msk [vmem:[%s10] sm:$0x7] %vm357, %v356
    %v359 = vld [vmem:[%s5] sm:$0x77]
    %v360 = vld [vmem:[%s6] sm:$0x77]
    %v361 = vld [vmem:[%s6 + $0x8] sm:$0x77]
    %v362 = vmax.f32 %v359, 0.0
    %v363 = vmin.f32 %v362, 1.0
    %v366 = vunpack.c.l.s4 839922192
    %v367 = vunpack.c.0.s8 %v366
    %v368 = vperm.slane %v356, %v367
    %v370 = vmul.f32 %v363, %v368
    %v371 = vadd.f32 %v370, 1.0
    %v372 = vlog2.pop %v371
    %v373 = vmul.f32 %v372, 0.6931472
    %v374 = vadd.f32 %v360, 1.0
    %v375 = vadd.f32 %v361, 1.0
    %v376 = vlog2.pop %v374
    %v377 = vmul.f32 %v376, 0.6931472
    %v378 = vlog2.pop %v375
    %v379 = vmul.f32 %v378, 0.6931472
    %v380 = vsub.f32 %v373, %v377
    %v381 = vsub.f32 %v373, %v379
    %v382 = vand.u32 2147483647, %v380
    %v383 = vand.u32 2147483647, %v381
    %386 = vst [vmem:[#allocation1] ss:$2 sm:$0xff] %v382
    %v387 = vld.sshfl [vmem:[#allocation1] sm:$0xff pattern:$0x75316420]
    %v388 = vld.sshfl [vmem:[#allocation1 + $0x8] sm:$0xff pattern:$0x75316420]
    %s389 = scalar_lea.vmem [#allocation1], 16
    %390 = vst [vmem:[%s389] ss:$2 sm:$0xff] %v383
    %v391 = vld.sshfl [vmem:[#allocation1 + $0x10] sm:$0xff pattern:$0x75316420]
    %v392 = vld.sshfl [vmem:[#allocation1 + $0x18] sm:$0xff pattern:$0x75316420]
    %vm397 = vcmask 1042432
    %v398 = vsel %vm397, %v387, 0.0
    %v399 = vsel %vm397, %v388, 0.0
    %v400 = vadd.f32 %v398, %v399
    %v401 = vsel %vm397, %v391, 0.0
    %v402 = vadd.f32 %v400, %v401
    %v403 = vsel %vm397, %v392, 0.0
    %v404 = vadd.f32 %v402, %v403
    %405 = vadd.xlane.f32.xlu0 %v404
    %v406 = vpop.xlane.xlu0 %405
    %v407 = vrot.slane %v406, 4
    %v408 = vadd.f32 %v406, %v407
    %v409 = vrot.slane %v408, 2
    %v410 = vadd.f32 %v408, %v409
    %v411 = vrot.slane %v410, 1
    %v412 = vadd.f32 %v410, %v411
    %s413 = vtos %v412
    %s414 = smul.f32 %s413, 0.0006510417
    %s415 = scalar_lea.smem [#allocation2], 0
    %416 = sst [smem:[%s415]] %s414
    // Predicated region
    $region30: #{_forward_with_light.1} parent=1 // pred_check
      _
    $region31: #{_forward_with_light.1} parent=1 // pred_check_branch
      %418 = sbr.rel (0) target = $region33
    $region32: #{_forward_with_light.1} parent=1 // pred_region
      _
    $region33: #{_forward_with_light.1} parent=1 // pred_fallthru
      _
    // Predicated region
    $region34: #{_forward_with_light.1} parent=1 // pred_check
      _
    $region35: #{_forward_with_light.1} parent=1 // pred_check_branch
      %420 = sbr.rel (0) target = $region37
    $region36: #{_forward_with_light.1} parent=1 // pred_region
      _
    $region37: #{_forward_with_light.1} parent=1 // pred_fallthru
      _
    // Predicated region
    $region38: #{_forward_with_light.1} parent=1 // pred_check
      _
    $region39: #{_forward_with_light.1} parent=1 // pred_check_branch
      %422 = sbr.rel (0) target = $region41
    $region40: #{_forward_with_light.1} parent=1 // pred_region
      _
    $region41: #{_forward_with_light.1} parent=1 // pred_fallthru
      _
    // Predicated region
    $region42: #{_forward_with_light.1} parent=1 // pred_check
      _
    $region43: #{_forward_with_light.1} parent=1 // pred_check_branch
      %424 = sbr.rel (0) target = $region45
    $region44: #{_forward_with_light.1} parent=1 // pred_region
      _
    $region45: #{_forward_with_light.1} parent=1 // pred_fallthru
      _
    // Predicated region
    $region46: #{_forward_with_light.1} parent=1 // pred_check
      _
    $region47: #{_forward_with_light.1} parent=1 // pred_check_branch
      %426 = sbr.rel (0) target = $region49
    $region48: #{_forward_with_light.1} parent=1 // pred_region
      %428 = vsyncadd [#allocation3], 0
      %s430 = sshll.u32 %s11, 4
      %s431 = int_to_ptr.hbm [resolvable:$true] %s430
      %433 = dma.smem_to_hbm [#allocation2], 16, %s431, [#allocation3]
    $region49: #{_forward_with_light.1} parent=1 // pred_fallthru
      _
    // Predicated region
    $region50: #{_forward_with_light.1} parent=1 // pred_check
      _
    $region51: #{_forward_with_light.1} parent=1 // pred_check_branch
      %435 = sbr.rel (0) target = $region53
    $region52: #{_forward_with_light.1} parent=1 // pred_region
      _
    $region53: #{_forward_with_light.1} parent=1 // pred_fallthru
      _
    // Predicated region
    $region54: #{_forward_with_light.1} parent=1 // pred_check
      _
    $region55: #{_forward_with_light.1} parent=1 // pred_check_branch
      %437 = sbr.rel (0) target = $region57
    $region56: #{_forward_with_light.1} parent=1 // pred_region
      _
    $region57: #{_forward_with_light.1} parent=1 // pred_fallthru
      _
    // Predicated region
    $region58: #{_forward_with_light.1} parent=1 // pred_check
      _
    $region59: #{_forward_with_light.1} parent=1 // pred_check_branch
      %439 = sbr.rel (0) target = $region61
    $region60: #{_forward_with_light.1} parent=1 // pred_region
      _
    $region61: #{_forward_with_light.1} parent=1 // pred_fallthru
      _
    // Predicated region
    $region62: #{_forward_with_light.1} parent=1 // pred_check
      _
    $region63: #{_forward_with_light.1} parent=1 // pred_check_branch
      %441 = sbr.rel (0) target = $region65
    $region64: #{_forward_with_light.1} parent=1 // pred_region
      _
    $region65: #{_forward_with_light.1} parent=1 // pred_fallthru
      _
    // Predicated region
    $region66: #{_forward_with_light.1} parent=1 // pred_check
      _
    $region67: #{_forward_with_light.1} parent=1 // pred_check_branch
      %443 = sbr.rel (0) target = $region69
    $region68: #{_forward_with_light.1} parent=1 // pred_region
      %445 = dma.done [#allocation3], 16
    $region69: #{_forward_with_light.1} parent=1 // pred_fallthru
      _
    %446 = sfence
    %447 = vsyncpa [#allocation3], 1

</llo_original>
